<compile_context>
chip_gen: v7x
topology: tpu7x:2x2x1
jax: 0.10.0
libtpu: 0.0.40
codegen_flags: <defaults>
</compile_context>

<pallas_src>
import math
import functools

import jax
import jax.numpy as jnp
from jax import lax
from jax.experimental import pallas as pl
from jax.experimental.pallas import tpu as pltpu


# ----------------------------------------------------------------------------
# Counter-based uniform keep-mask (portable: plain jnp ops only)
# ----------------------------------------------------------------------------
def _keep_mask(shape, offsets, strides, seed, p):
    """Boolean mask, True with probability (1 - p).

    The random value for each element depends only on its *global* linear index
    and the seed, so the mask is independent of the tiling/grid layout.
    """
    lin = jnp.zeros(shape, jnp.int32)
    for axis, (off, stride) in enumerate(zip(offsets, strides)):
        idx = lax.broadcasted_iota(jnp.int32, shape, axis) + off
        lin = lin + idx * stride
    h = lin.astype(jnp.uint32) ^ (seed.astype(jnp.uint32) * jnp.uint32(0x9E3779B9))
    # lowbias32-style integer mixing (VPU only).
    h = (h ^ (h >> jnp.uint32(16))) * jnp.uint32(0x7FEB352D)
    h = (h ^ (h >> jnp.uint32(15))) * jnp.uint32(0x846CA68B)
    h = h ^ (h >> jnp.uint32(16))
    h24 = (h >> jnp.uint32(8)).astype(jnp.int32)          # uniform in [0, 2**24)
    thresh = min(max(int(round(p * float(1 << 24))), 0), 1 << 24)
    return h24 >= jnp.int32(thresh)                        # P(keep) = 1 - p


def _apply_dropout(y, keep, p):
    scale = jnp.asarray(1.0 / (1.0 - p), dtype=y.dtype)
    return jnp.where(keep, y * scale, jnp.zeros_like(y))


# ----------------------------------------------------------------------------
# Kernels
# ----------------------------------------------------------------------------
def _pe_kernel_3d(seed_ref, x_ref, pe_ref, o_ref, *, p, train, B, D, ts, td):
    # x_ref/o_ref: (ts, B, td); pe_ref: (ts, 1, td) broadcast over batch in-register.
    y = x_ref[...] + pe_ref[...]
    if train and p >= 1.0:
        y = jnp.zeros_like(y)
    elif train and p > 0.0:
        keep = _keep_mask(
            x_ref.shape,
            offsets=(pl.program_id(0) * ts, 0, pl.program_id(1) * td),
            strides=(B * D, D, 1),
            seed=seed_ref[0], p=p)
        y = _apply_dropout(y, keep, p)
    o_ref[...] = y.astype(o_ref.dtype)


def _pe_kernel_2d(seed_ref, x_ref, pe_ref, o_ref, *, p, train, B, D, ts):
    # x_ref/o_ref: (ts, B*D) lane-flattened; pe_ref: (ts, D) repeated over batch
    # in-kernel (column c = b*D + d  <->  pe[d]).
    pe = pe_ref[...]
    pe_row = jnp.tile(pe, (1, B)) if B > 1 else pe
    y = x_ref[...] + pe_row
    if train and p >= 1.0:
        y = jnp.zeros_like(y)
    elif train and p > 0.0:
        keep = _keep_mask(
            x_ref.shape,
            offsets=(pl.program_id(0) * ts, 0),
            strides=(B * D, 1),
            seed=seed_ref[0], p=p)
        y = _apply_dropout(y, keep, p)
    o_ref[...] = y.astype(o_ref.dtype)


# ----------------------------------------------------------------------------
# Tiling / VMEM budgeting
# ----------------------------------------------------------------------------
def _vmem_budget():
    """(pipeline budget bytes, vmem_limit_bytes) - generation aware, safe fallback."""
    cap = 64 << 20
    try:
        cap = int(getattr(pltpu.get_tpu_info(), "vmem_capacity_bytes", cap))
    except Exception:
        pass
    vmem_limit = min((cap * 3) // 4, 96 << 20)       # v7x: 48 MiB, v5e/v6e: 96 MiB
    budget = max(8 << 20, min(vmem_limit - (8 << 20), 48 << 20))
    return budget, vmem_limit


def _choose_tile_rows(n_rows, per_row_bytes, *, budget_bytes, buffers=2):
    """Largest sequence tile whose full double-buffered footprint fits the budget."""
    rows = budget_bytes // (buffers * max(per_row_bytes, 1))
    rows = max(8, (rows // 8) * 8)
    if n_rows >= 16:
        # Guarantee >= 2 grid steps so a "parallel" grid can use both v7x TensorCores.
        half = (((n_rows + 1) // 2) + 7) // 8 * 8
        rows = min(rows, half)
    return min(rows, n_rows)


# ----------------------------------------------------------------------------
# Module
# ----------------------------------------------------------------------------
class PositionalEncoding:
    def __init__(self, d_model: int, dropout: float = 0.1, max_len: int = 5000):
        self.p = float(dropout)
        self.d_model = d_model
        # Same construction math as the PyTorch __init__ (f32 master copy).
        position = jnp.arange(max_len, dtype=jnp.float32)[:, None]               # (L, 1)
        div_term = jnp.exp(
            jnp.arange(0, d_model, 2, dtype=jnp.float32)
            * (-math.log(10000.0) / d_model))                                    # (D/2,)
        pe = jnp.zeros((max_len, 1, d_model), dtype=jnp.float32)
        pe = pe.at[:, 0, 0::2].set(jnp.sin(position * div_term))
        pe = pe.at[:, 0, 1::2].set(jnp.cos(position * div_term))
        self.pe = pe                                                              # (L, 1, D)
        self._pe_cache = {}                                                       # dtype -> cast pe

    def _pe_in(self, dtype):
        key = jnp.dtype(dtype).name
        if key not in self._pe_cache:
            self._pe_cache[key] = self.pe.astype(dtype)
        return self._pe_cache[key]

    def __call__(self, x: jax.Array, *, train: bool = False, seed: int = 0) -> jax.Array:
        S, B, D = x.shape
        dtype = x.dtype
        itemsize = jnp.dtype(dtype).itemsize
        seed_arr = jnp.array([seed], dtype=jnp.int32)
        pe_full = self._pe_in(dtype)
        budget, vmem_limit = _vmem_budget()

        if D % 128 == 0:
            # Dense 3-D path: (B, D) maps to (sublane, lane); pe read once per seq row.
            pe_slice = pe_full[:S]                                                # (S, 1, D)
            b_pad = ((B + 7) // 8) * 8
            per_col = (2 * b_pad + 8) * itemsize      # x + out (B sublane-padded) + pe (1->8)
            td = D
            if 2 * 8 * per_col * td > budget:         # even 8 rows too big -> tile lanes too
                td = max(128, (budget // (2 * 8 * per_col)) // 128 * 128)
            ts = _choose_tile_rows(S, per_col * td, budget_bytes=budget)
            kernel = functools.partial(_pe_kernel_3d, p=self.p, train=train,
                                       B=B, D=D, ts=ts, td=td)
            return pl.pallas_call(
                kernel,
                out_shape=jax.ShapeDtypeStruct((S, B, D), dtype),
                grid_spec=pltpu.PrefetchScalarGridSpec(
                    num_scalar_prefetch=1,                                        # seed -> SMEM
                    grid=(pl.cdiv(S, ts), pl.cdiv(D, td)),
                    in_specs=[
                        pl.BlockSpec((ts, B, td), lambda i, j, s: (i, 0, j)),
                        pl.BlockSpec((ts, 1, td), lambda i, j, s: (i, 0, j)),
                    ],
                    out_specs=pl.BlockSpec((ts, B, td), lambda i, j, s: (i, 0, j)),
                ),
                compiler_params=pltpu.CompilerParams(
                    dimension_semantics=("parallel", "parallel"),
                    vmem_limit_bytes=vmem_limit),
            )(seed_arr, x, pe_slice)

        # Fallback (D not a multiple of 128): lane-flatten to (S, B*D); pe stays (S, D)
        # and is repeated over batch in-kernel (no materialized HBM broadcast).
        # TODO(synk): if B*D is not a 128-multiple this takes masked stores; acceptable
        # for the tiny tensors that hit this path.
        bd = B * D
        x2d = x.reshape(S, bd)
        pe2d = pe_full[:S, 0, :]                                                  # (S, D)
        bd_pad = -(-bd // 128) * 128
        d_pad = -(-D // 128) * 128
        per_row = (2 * bd_pad + d_pad) * itemsize
        ts = _choose_tile_rows(S, per_row, budget_bytes=budget)
        kernel = functools.partial(_pe_kernel_2d, p=self.p, train=train, B=B, D=D, ts=ts)
        out2d = pl.pallas_call(
            kernel,
            out_shape=jax.ShapeDtypeStruct((S, bd), dtype),
            grid_spec=pltpu.PrefetchScalarGridSpec(
                num_scalar_prefetch=1,
                grid=(pl.cdiv(S, ts),),
                in_specs=[
                    pl.BlockSpec((ts, bd), lambda i, s: (i, 0)),
                    pl.BlockSpec((ts, D), lambda i, s: (i, 0)),
                ],
                out_specs=pl.BlockSpec((ts, bd), lambda i, s: (i, 0)),
            ),
            compiler_params=pltpu.CompilerParams(
                dimension_semantics=("parallel",),
                vmem_limit_bytes=vmem_limit),
        )(seed_arr, x2d, pe2d)
        return out2d.reshape(S, B, D)


# ----------------------------------------------------------------------------
if __name__ == "__main__":
    # --- test 1: D % 128 != 0 -> 2-D fallback, eval mode ---
    seq_len, batch, d_model = 8, 2, 32
    x = jax.random.normal(jax.random.PRNGKey(0), (seq_len, batch, d_model), dtype=jnp.float32)
    pos_enc = PositionalEncoding(d_model=d_model, dropout=0.1, max_len=5000)

    out = jax.block_until_ready(pos_enc(x, train=False))
    ref = x + pos_enc.pe[:seq_len]
    assert out.shape == (seq_len, batch, d_model)
    assert jnp.allclose(out, ref, atol=1e-6), "eval-mode mismatch vs reference"

    # --- test 2: same shapes, train mode (inverted dropout via in-kernel hash PRNG) ---
    out_tr = jax.block_until_ready(pos_enc(x, train=True, seed=123))
    scale = 1.0 / (1.0 - pos_enc.p)
    is_zero = out_tr == 0.0
    consistent = jnp.where(is_zero, True,
                           jnp.isclose(out_tr, ref * scale, atol=1e-5, rtol=1e-5))
    assert bool(jnp.all(consistent)), "train-mode values are not 0 or scaled (x+pe)"
    n_zero = int(jnp.sum(is_zero))
    assert 0 < n_zero < out_tr.size, "dropout mask degenerate"

    # --- test 3: dense 3-D path (D % 128 == 0, B < 8), eval mode ---
    s2, b2, d2 = 16, 2, 128
    x2 = jax.random.normal(jax.random.PRNGKey(1), (s2, b2, d2), dtype=jnp.float32)
    pe_mod2 = PositionalEncoding(d_model=d2, dropout=0.1, max_len=64)
    out2 = jax.block_until_ready(pe_mod2(x2, train=False))
    ref2 = x2 + pe_mod2.pe[:s2]
    assert jnp.allclose(out2, ref2, atol=1e-6), "3-D path mismatch vs reference"

    # --- test 4: dense 3-D path, train mode (exercise 3-D dropout mask) ---
    out2_tr = jax.block_until_ready(pe_mod2(x2, train=True, seed=7))
    scale2 = 1.0 / (1.0 - pe_mod2.p)
    ok2 = jnp.where(out2_tr == 0.0, True,
                    jnp.isclose(out2_tr, ref2 * scale2, atol=1e-5, rtol=1e-5))
    assert bool(jnp.all(ok2)), "3-D train-mode values are not 0 or scaled (x+pe)"

    print("KERNEL_OK")
</pallas_src>

<mosaic_0001>
module attributes {stable_mosaic.version = 11 : i64} {
  func.func @_pe_kernel_2d(%arg0: i32, %arg1: memref<1xi32, #tpu.memory_space<smem>>, %arg2: memref<8x64xf32, #tpu.memory_space<vmem>>, %arg3: memref<8x32xf32, #tpu.memory_space<vmem>>, %arg4: memref<8x64xf32, #tpu.memory_space<vmem>>) attributes {dimension_semantics = [#tpu.dimension_semantics<parallel>], iteration_bounds = array<i64: 1>, scalar_prefetch = 1 : i64, scratch_operands = 0 : i64, tpu.core_type = #tpu.core_type<tc>, window_params = [{transform_indices = @transform_0, window_bounds = array<i64: 8, 64>}, {transform_indices = @transform_1, window_bounds = array<i64: 8, 32>}, {transform_indices = @transform_2, window_bounds = array<i64: 8, 64>}]} {
    %c0 = arith.constant 0 : index
    %c0_0 = arith.constant 0 : index
    %0 = vector.load %arg3[%c0, %c0_0] : memref<8x32xf32, #tpu.memory_space<vmem>>, vector<8x32xf32>
    %1 = tpu.concatenate %0, %0 in 1 : vector<8x32xf32>, vector<8x32xf32> -> vector<8x64xf32>
    %c0_1 = arith.constant 0 : index
    %c0_2 = arith.constant 0 : index
    %2 = vector.load %arg2[%c0_1, %c0_2] : memref<8x64xf32, #tpu.memory_space<vmem>>, vector<8x64xf32>
    %3 = arith.addf %2, %1 : vector<8x64xf32>
    %c0_3 = arith.constant 0 : index
    %c0_4 = arith.constant 0 : index
    %4 = vector.load %arg4[%c0_3, %c0_4] : memref<8x64xf32, #tpu.memory_space<vmem>>, vector<8x64xf32>
    tpu.vector_store %arg4[%c0_3, %c0_4], %3 {strides = array<i32>} : memref<8x64xf32, #tpu.memory_space<vmem>>, vector<8x64xf32>,
    return
  }
  func.func @transform_0(%arg0: i32, %arg1: memref<1xi32, #tpu.memory_space<smem>>) -> (i32, i32) {
    %c0_i32 = arith.constant 0 : i32
    %c0_i32_0 = arith.constant 0 : i32
    return %arg0, %c0_i32 : i32, i32
  }
  func.func @transform_1(%arg0: i32, %arg1: memref<1xi32, #tpu.memory_space<smem>>) -> (i32, i32) {
    %c0_i32 = arith.constant 0 : i32
    %c0_i32_0 = arith.constant 0 : i32
    return %arg0, %c0_i32 : i32, i32
  }
  func.func @transform_2(%arg0: i32, %arg1: memref<1xi32, #tpu.memory_space<smem>>) -> (i32, i32) {
    %c0_i32 = arith.constant 0 : i32
    %c0_i32_0 = arith.constant 0 : i32
    return %arg0, %c0_i32 : i32, i32
  }
}

</mosaic_0001>

<llo_original>
// kernel: tpu_custom_call.1
$region0: #{tpu_custom_call.1}
  #allocation0 [shape = 'u32[]', space=smem, size = 0x4, offset = 0x4, fixed_abs, tag = 'smem constant byte address 0x4 - core index']
  #allocation1 [shape = 'u32[144,128]{1,0:T(1,128)}', space=vmem, size = 0x12000, scoped, tag = 'internal scratch']
  #allocation2 [shape = 's32[1]{0}', space=sflag, size = 0x4, scoped, tag = 'scoped memory for tpu_custom_call.1']
  #allocation3 [shape = 's32[1]{0:T(128)S(6)}', space=smem, size = 0x200, scoped, tag = 'prefetched SMEM operand 0']
  %s0 = inlined_call_operand.<no memory space> [shape: s32[1], index: 0, kind: input, shape index: {}]
  %s1 = inlined_call_operand.hbm [shape: f32[8,64], index: 1, kind: input, shape index: {}]
  %s2 = inlined_call_operand.hbm [shape: f32[8,32], index: 2, kind: input, shape index: {}]
  %s3 = inlined_call_operand.hbm [shape: f32[8,64], index: 3, kind: output, shape index: {}]
  %s4 = sld [smem:[#allocation0]]
  $region26: #{tpu_custom_call.1} parent=0
    _
  %s6 = ssub.s32 1, %s4
  %s7 = scalar_select 0, %s6, %s4
  %8 = sst [smem:[#allocation3]] %s0
  $region1: #{tpu_custom_call.1} parent=0
    #allocation4 [shape = 'u8[4096]{0}', space=vmem, size = 0x1000, scoped, tag = 'input window, operand 1, single buffered']
    #allocation5 [shape = 's32[1]{0}', space=sflag, size = 0x4, scoped, tag = 'scoped memory for tpu_custom_call.1']
    #allocation6 [shape = 's32[1]{0}', space=sflag, size = 0x4, scoped, tag = 'scoped memory for tpu_custom_call.1']
    #allocation7 [shape = 'u8[4096]{0}', space=vmem, size = 0x1000, scoped, tag = 'input window, operand 2, single buffered']
    #allocation8 [shape = 's32[1]{0}', space=sflag, size = 0x4, scoped, tag = 'scoped memory for tpu_custom_call.1']
    #allocation9 [shape = 'u8[4096]{0}', space=vmem, size = 0x1000, scoped, tag = 'output window, operand 0, single buffered']
    %9 = vsyncpa [#allocation5], 0
    %10 = vsyncpa [#allocation8], 0
    %11 = vsyncpa [#allocation6], 0
    // Predicated region
    $region2: #{tpu_custom_call.1} parent=1 // pred_check
      _
    $region3: #{tpu_custom_call.1} parent=1 // pred_check_branch
      %13 = sbr.rel (0) target = $region5
    $region4: #{tpu_custom_call.1} parent=1 // pred_region
      %s15 = ssub.s32 128, 128
      %16 = vsyncadd [#allocation5], %s15
      %s18 = sshll.u32 [#allocation4], 4
      %s19 = int_to_ptr.vmem [resolvable:$true] %s18
      %21 = dma.hbm_to_vmem [thread:$0]  %s1, 128, %s19, [#allocation5]
    $region5: #{tpu_custom_call.1} parent=1 // pred_fallthru
      _
    // Predicated region
    $region6: #{tpu_custom_call.1} parent=1 // pred_check
      _
    $region7: #{tpu_custom_call.1} parent=1 // pred_check_branch
      %23 = sbr.rel (0) target = $region9
    $region8: #{tpu_custom_call.1} parent=1 // pred_region
      %s25 = ssub.s32 128, 128
      %26 = vsyncadd [#allocation8], %s25
      %s28 = sshll.u32 [#allocation7], 4
      %s29 = int_to_ptr.vmem [resolvable:$true] %s28
      %31 = dma.hbm_to_vmem [thread:$0]  %s2, 128, %s29, [#allocation8]
    $region9: #{tpu_custom_call.1} parent=1 // pred_fallthru
      _
    // Predicated region
    $region10: #{tpu_custom_call.1} parent=1 // pred_check
      _
    $region11: #{tpu_custom_call.1} parent=1 // pred_check_branch
      %33 = sbr.rel (0) target = $region13
    $region12: #{tpu_custom_call.1} parent=1 // pred_region
      %34 = dma.done [#allocation5], 128
    $region13: #{tpu_custom_call.1} parent=1 // pred_fallthru
      _
    // Predicated region
    $region14: #{tpu_custom_call.1} parent=1 // pred_check
      _
    $region15: #{tpu_custom_call.1} parent=1 // pred_check_branch
      %36 = sbr.rel (0) target = $region17
    $region16: #{tpu_custom_call.1} parent=1 // pred_region
      %37 = dma.done [#allocation8], 128
    $region17: #{tpu_custom_call.1} parent=1 // pred_fallthru
      _
    %v38 = vld [vmem:[#allocation7] sm:$0xff]
    %40 = vrot.lane.b32.xlu0 %v38, 32
    %v41 = vpop.permute.xlu0 %40
    %vm43 = vcmask 261120
    %v44 = vsel %vm43, %v38, %v41
    %v45 = vld [vmem:[#allocation4] sm:$0xff]
    %v46 = vadd.f32 %v45, %v44
    %vm47 = vcmask 523264
    %48 = vst.msk [vmem:[#allocation9] sm:$0xff] %vm47, %v46
    // Predicated region
    $region18: #{tpu_custom_call.1} parent=1 // pred_check
      _
    $region19: #{tpu_custom_call.1} parent=1 // pred_check_branch
      %50 = sbr.rel (0) target = $region21
    $region20: #{tpu_custom_call.1} parent=1 // pred_region
      %s52 = ssub.s32 128, 128
      %53 = vsyncadd [#allocation6], %s52
      %s55 = sshll.u32 [#allocation9], 4
      %s56 = int_to_ptr.vmem [resolvable:$true] %s55
      %58 = dma.vmem_to_hbm [thread:$0]  %s56, 128, %s3, [#allocation6]
    $region21: #{tpu_custom_call.1} parent=1 // pred_fallthru
      _
    // Predicated region
    $region22: #{tpu_custom_call.1} parent=1 // pred_check
      _
    $region23: #{tpu_custom_call.1} parent=1 // pred_check_branch
      %60 = sbr.rel (0) target = $region25
    $region24: #{tpu_custom_call.1} parent=1 // pred_region
      %61 = dma.done [#allocation6], 128
    $region25: #{tpu_custom_call.1} parent=1 // pred_fallthru
      _
    %62 = vsyncpa [#allocation5], 1
    %63 = vsyncpa [#allocation8], 1
    %64 = vsyncpa [#allocation6], 1

</llo_original>
